<compile_context>
chip_gen: v7x
topology: tpu7x:2x2x1
jax: 0.10.0
libtpu: 0.0.40
codegen_flags: <defaults>
</compile_context>

<pallas_src>
import jax
import jax.numpy as jnp
from jax import lax
from jax.experimental import pallas as pl
from jax.experimental.pallas import tpu as pltpu


def classifier_kernel(x_ref, wt_ref, b_ref, o_ref):
    # x_ref:  (B, K)  bf16  fused [text | pooled-vis] activations (same block every step,
    #                        so it is DMA'd into VMEM once and stays resident)
    # wt_ref: (tn, K) bf16  streamed, contiguous row tile of the transposed weight
    # b_ref:  (1, tn) f32   bias tile
    # o_ref:  (B, tn) f32   logits tile
    acc = lax.dot_general(
        x_ref[...], wt_ref[...],
        dimension_numbers=(((1,), (1,)), ((), ())),   # contract K with K  ->  (B, tn)
        preferred_element_type=jnp.float32)            # MXU, f32 accumulation
    o_ref[...] = (acc + b_ref[...]).astype(o_ref.dtype)


def prepare_classifier_params(w_full, bias):
    """ONE-TIME (model-init) dtype/layout prep for the classifier parameters.

    w_full: (K, N) f32  classifier weight, K = 768 + 512 in_features, N = n_answers
    bias:   (N,)   f32
    Returns:
      w_t_bf16: (N, K) bf16 -- transposed so every output tile is a contiguous row block
      bias2d:   (1, N) f32
    """
    w_t_bf16 = jnp.asarray(w_full, jnp.float32).T.astype(jnp.bfloat16)
    bias2d = jnp.asarray(bias, jnp.float32).reshape(1, -1)
    return w_t_bf16, bias2d


def baseline_forward(text_feats, vis_feat_map, w_t_bf16, bias2d, *, tn=1024):
    """Trainable head of BaselineNet: GAP(vis) -> concat(text, vis) -> Linear.

    text_feats:   (B, Dt) f32       -- RoBERTa pooler_output (frozen backbone output)
    vis_feat_map: (B, C, H, W) f32  -- resnet18[:-2](image)   (frozen backbone output)
    w_t_bf16:     (N, Dt + C) bf16  -- pre-transposed, pre-cast classifier weight
    bias2d:       (1, N) f32
    Returns logits (B, N) f32.
    """
    B, Dt = text_feats.shape
    _, C, H, W = vis_feat_map.shape
    N, K = w_t_bf16.shape
    assert K == Dt + C, "classifier in_features must equal Dt + C"
    assert bias2d.shape == (1, N)

    # Hoisted out of the tile loop: global average pool over spatial dims
    # (== .mean(dim=(2, 3))) and the modality concat.  Tiny (B*K elements), done once.
    vis_pooled = jnp.mean(vis_feat_map, axis=(2, 3))                      # (B, C)
    fused_bf16 = jnp.concatenate([text_feats, vis_pooled], axis=1).astype(jnp.bfloat16)

    n_tiles = pl.cdiv(N, tn)   # edge block is clipped by Pallas; no pre-padding needed

    # Advisory: this custom call is weight-bandwidth bound.
    cost = pl.CostEstimate(
        flops=2 * B * K * N,
        transcendentals=0,
        bytes_accessed=(N * K * 2      # bf16 classifier weight (dominant stream)
                        + B * K * 2    # bf16 fused activation
                        + N * 4        # f32 bias
                        + B * N * 4),  # f32 logits
    )

    out = pl.pallas_call(
        classifier_kernel,
        out_shape=jax.ShapeDtypeStruct((B, N), jnp.float32),
        grid_spec=pltpu.PrefetchScalarGridSpec(
            num_scalar_prefetch=0,
            grid=(n_tiles,),                                 # tile over answer logits
            in_specs=[
                pl.BlockSpec((B, K), lambda j: (0, 0)),      # fused activations (resident)
                pl.BlockSpec((tn, K), lambda j: (j, 0)),     # contiguous bf16 weight row tile
                pl.BlockSpec((1, tn), lambda j: (0, j)),     # bias tile
            ],
            out_specs=pl.BlockSpec((B, tn), lambda j: (0, j)),
        ),
        compiler_params=pltpu.CompilerParams(
            dimension_semantics=("parallel",)),              # shards tiles across v7x's 2 TCs
        cost_estimate=cost,
    )(fused_bf16, w_t_bf16, bias2d)

    return out


if __name__ == "__main__":
    # Small deterministic shapes consistent with the module:
    #   RoBERTa-base hidden = 768, ResNet18 trunk output = 512 channels over 7x7.
    #   Real n_answers default is 5217; use a small stand-in that is deliberately NOT a
    #   multiple of the tile size to exercise the edge-block clipping path.
    B, Dt, C, H, W = 2, 768, 512, 7, 7
    N_ANSWERS = 777

    key = jax.random.PRNGKey(0)
    k_txt, k_vis, k_w, k_b = jax.random.split(key, 4)

    # TODO(synk): frozen RoBERTa / ResNet18 backbone outputs are synthesized deterministically.
    text_feats = jax.random.normal(k_txt, (B, Dt), dtype=jnp.float32)          # pooler_output
    vis_nchw = jax.random.normal(k_vis, (B, C, H, W), dtype=jnp.float32)       # vis_encoder(image)

    # Classifier parameters: Linear(768 + 512, n_answers), deterministic init.
    w_full = jax.random.normal(k_w, (Dt + C, N_ANSWERS), dtype=jnp.float32) * 0.02
    bias = jax.random.normal(k_b, (N_ANSWERS,), dtype=jnp.float32) * 0.02

    # One-time parameter prep (model-init time in a real deployment; NOT per forward).
    w_t_bf16, bias2d = prepare_classifier_params(w_full, bias)

    # tn=256 at this small demo N gives 4 grid steps incl. a partial edge block,
    # exercising both the tile loop and the clipping path (production default is 1024).
    out = baseline_forward(text_feats, vis_nchw, w_t_bf16, bias2d, tn=256)
    out = jax.block_until_ready(out)

    # Pure-JAX references of the PyTorch forward (GAP -> concat -> linear).
    vis_pooled_ref = vis_nchw.mean(axis=(2, 3))                                # (B, C)
    fused_ref = jnp.concatenate([text_feats, vis_pooled_ref], axis=1)          # (B, 1280)
    ref_f32 = fused_ref @ w_full + bias                                        # f32 semantics
    ref_bf16 = jnp.dot(fused_ref.astype(jnp.bfloat16),                         # bf16-matched path
                       w_full.astype(jnp.bfloat16),
                       preferred_element_type=jnp.float32) + bias

    assert out.shape == (B, N_ANSWERS)
    # bf16-matched reference is the authoritative check (kernel streams bf16 weights).
    assert jnp.allclose(out, ref_bf16, atol=1e-2, rtol=1e-2), "mismatch vs bf16-matched reference"
    assert jnp.allclose(out, ref_f32, atol=5e-2, rtol=5e-2), "mismatch vs f32 reference"
    print("KERNEL_OK")
</pallas_src>

<mosaic_0001>
module attributes {stable_mosaic.version = 11 : i64} {
  func.func @classifier_kernel(%arg0: i32, %arg1: memref<2x1280xbf16, #tpu.memory_space<vmem>>, %arg2: memref<256x1280xbf16, #tpu.memory_space<vmem>>, %arg3: memref<1x256xf32, #tpu.memory_space<vmem>>, %arg4: memref<2x256xf32, #tpu.memory_space<vmem>>) attributes {dimension_semantics = [#tpu.dimension_semantics<parallel>], iteration_bounds = array<i64: 4>, scalar_prefetch = 0 : i64, scratch_operands = 0 : i64, tpu.core_type = #tpu.core_type<tc>, window_params = [{pipeline_mode = #tpu.pipeline_mode<synchronous>, transform_indices = @transform_0, window_bounds = array<i64: 2, 1280>}, {transform_indices = @transform_1, window_bounds = array<i64: 256, 1280>}, {transform_indices = @transform_2, window_bounds = array<i64: 1, 256>}, {transform_indices = @transform_3, window_bounds = array<i64: 2, 256>}]} {
    %c0 = arith.constant 0 : index
    %c0_0 = arith.constant 0 : index
    %0 = vector.load %arg1[%c0, %c0_0] : memref<2x1280xbf16, #tpu.memory_space<vmem>>, vector<2x1280xbf16>
    %c0_1 = arith.constant 0 : index
    %c0_2 = arith.constant 0 : index
    %1 = vector.load %arg2[%c0_1, %c0_2] : memref<256x1280xbf16, #tpu.memory_space<vmem>>, vector<256x1280xbf16>
    %cst = arith.constant dense<0.000000e+00> : vector<2x256xf32>
    %2 = tpu.matmul %0, %1, %cst {dimension_numbers = #tpu.dot_dimension_numbers<[1], [1], [0], [0], [0, 0, 1, 0], [], []>} : vector<2x1280xbf16>, vector<256x1280xbf16>, vector<2x256xf32> -> vector<2x256xf32>
    %c0_3 = arith.constant 0 : index
    %c0_4 = arith.constant 0 : index
    %3 = vector.load %arg3[%c0_3, %c0_4] : memref<1x256xf32, #tpu.memory_space<vmem>>, vector<1x256xf32>
    %4 = vector.broadcast %3 : vector<1x256xf32> to vector<2x256xf32>
    %5 = arith.addf %2, %4 : vector<2x256xf32>
    %c0_5 = arith.constant 0 : index
    %c0_6 = arith.constant 0 : index
    %6 = vector.load %arg4[%c0_5, %c0_6] : memref<2x256xf32, #tpu.memory_space<vmem>>, vector<2x256xf32>
    tpu.vector_store %arg4[%c0_5, %c0_6], %5 {strides = array<i32>} : memref<2x256xf32, #tpu.memory_space<vmem>>, vector<2x256xf32>,
    return
  }
  func.func @transform_0(%arg0: i32) -> (i32, i32) {
    %c0_i32 = arith.constant 0 : i32
    %c0_i32_0 = arith.constant 0 : i32
    %c0_i32_1 = arith.constant 0 : i32
    return %c0_i32, %c0_i32_0 : i32, i32
  }
  func.func @transform_1(%arg0: i32) -> (i32, i32) {
    %c0_i32 = arith.constant 0 : i32
    %c0_i32_0 = arith.constant 0 : i32
    return %arg0, %c0_i32 : i32, i32
  }
  func.func @transform_2(%arg0: i32) -> (i32, i32) {
    %c0_i32 = arith.constant 0 : i32
    %c0_i32_0 = arith.constant 0 : i32
    return %c0_i32, %arg0 : i32, i32
  }
  func.func @transform_3(%arg0: i32) -> (i32, i32) {
    %c0_i32 = arith.constant 0 : i32
    %c0_i32_0 = arith.constant 0 : i32
    return %c0_i32, %arg0 : i32, i32
  }
}

</mosaic_0001>

<llo_original>
// kernel: tpu_custom_call.1
$region0: #{tpu_custom_call.1}
  #allocation0 [shape = 'u32[]', space=smem, size = 0x4, offset = 0x4, fixed_abs, tag = 'smem constant byte address 0x4 - core index']
  #allocation1 [shape = 'u32[144,128]{1,0:T(1,128)}', space=vmem, size = 0x12000, scoped, tag = 'internal scratch']
  %s0 = inlined_call_operand.hbm [shape: bf16[2,1280], index: 0, kind: input, shape index: {}]
  %s1 = inlined_call_operand.hbm [shape: bf16[777,1280], index: 1, kind: input, shape index: {}]
  %s2 = inlined_call_operand.hbm [shape: f32[1,777], index: 2, kind: input, shape index: {}]
  %s3 = inlined_call_operand.hbm [shape: f32[2,777], index: 3, kind: output, shape index: {}]
  %s4 = sld [smem:[#allocation0]]
  $region57: #{tpu_custom_call.1} parent=0
    _
  %s6 = ssub.s32 1, %s4
  %s7 = scalar_select 0, %s6, %s4
  $region1: #{tpu_custom_call.1} parent=0
    #allocation2 [shape = 'u8[5120]{0}', space=vmem, size = 0x1400, scoped, tag = 'input window, operand 0, single buffered']
    #allocation3 [shape = 's32[2]{0}', space=sflag, size = 0x8, scoped, tag = 'scoped memory for tpu_custom_call.1']
    #allocation4 [shape = 's32[2]{0}', space=sflag, size = 0x8, scoped, tag = 'scoped memory for tpu_custom_call.1']
    #allocation5 [shape = 'u8[1310720]{0}', space=vmem, size = 0x140000, scoped, tag = 'input window, operand 1']
    #allocation6 [shape = 's32[2]{0}', space=sflag, size = 0x8, scoped, tag = 'scoped memory for tpu_custom_call.1']
    #allocation7 [shape = 'u8[2048]{0}', space=vmem, size = 0x800, scoped, tag = 'input window, operand 2']
    #allocation8 [shape = 'u8[4096]{0}', space=vmem, size = 0x1000, scoped, tag = 'output window, operand 0']
    %8 = vsyncpa [#allocation3], 0
    %9 = vsyncpa [#allocation6], 0
    %s10 = scalar_lea.sflag [#allocation6], 1
    %11 = vsyncpa %s10, 0
    %12 = vsyncpa [#allocation4], 0
    %s13 = scalar_lea.sflag [#allocation4], 1
    %14 = vsyncpa %s13, 0
    loop: start=0, step=1, limit=6
    $region2: #{tpu_custom_call.1} parent=1 // loop_pre_header
      _
    $region3: #{tpu_custom_call.1} parent=1 // loop_header
      %s16 = sphi 0, %s20
      %p17 = scmp.ge.s32.totalorder %s16, 6
      %s24 = sphi 0, %s24
      %s26 = sphi 0, %s24
      %s27 = sphi 0, %s26
      %s41 = sphi 0, %s27
      %s47 = sphi 0, %s49
      %s50 = sphi 0, %s47
      %s51 = sphi 0, %s50
      %s67 = sphi 0, %s51
      %s73 = sphi 0, %s75
      %s76 = sphi 0, %s73
      %s77 = sphi 0, %s76
      %s93 = sphi 0, %s77
      %s99 = sphi 0, %s101
      %s102 = sphi 0, %s99
      %s103 = sphi 0, %s102
      %s119 = sphi 0, %s103
    $region4: #{tpu_custom_call.1} parent=1 // loop_header_branch
      %19 = sbr.rel (%p17) target = $region8
    $region5: #{tpu_custom_call.1} parent=1 // loop_body
      %s21 = ssub.s32 %s16, 1
      %s22 = ssub.s32 %s16, 2
      %s23 = sadd.s32 %s16, 1
      %s25 = sadd.s32 %s24, 1
      %p28 = scmp.eq.s32.totalorder %s16, 3
      %p29 = scmp.ne.s32.totalorder %s24, %s26
      %p30 = scmp.eq.s32.totalorder %s16, 0
      %p31 = por %p29, %p30
      %p32 = scmp.ne.s32.totalorder %s24, %s26
      %p33 = scmp.eq.s32.totalorder %s21, 3
      %p34 = por %p32, %p33
      %p35 = scmp.ne.s32.totalorder %s26, %s27
      %p36 = scmp.eq.s32.totalorder %s21, 0
      %p37 = por %p35, %p36
      %p38 = scmp.ne.s32.totalorder %s26, %s27
      %p39 = scmp.eq.s32.totalorder %s22, 3
      %p40 = por %p38, %p39
      %p42 = scmp.ne.s32.totalorder %s27, %s41
      %p43 = scmp.eq.s32.totalorder %s22, 0
      %p44 = por %p42, %p43
      %s45 = ssub.s32 %s16, %s23
      %p46 = scmp.eq.s32.totalorder %s45, 0
      %s48 = sadd.s32 %s47, 1
      %s49 = scalar_select %p46, %s47, %s48
      %p52 = pneg %p46
      %p53 = scmp.eq.s32.totalorder %s16, 3
      %p54 = por %p52, %p53
      %p55 = scmp.ne.s32.totalorder %s47, %s50
      %p56 = scmp.eq.s32.totalorder %s16, 0
      %p57 = por %p55, %p56
      %p58 = scmp.ne.s32.totalorder %s47, %s50
      %p59 = scmp.eq.s32.totalorder %s21, 3
      %p60 = por %p58, %p59
      %p61 = scmp.ne.s32.totalorder %s50, %s51
      %p62 = scmp.eq.s32.totalorder %s21, 0
      %p63 = por %p61, %p62
      %p64 = scmp.ne.s32.totalorder %s50, %s51
      %p65 = scmp.eq.s32.totalorder %s22, 3
      %p66 = por %p64, %p65
      %p68 = scmp.ne.s32.totalorder %s51, %s67
      %p69 = scmp.eq.s32.totalorder %s22, 0
      %p70 = por %p68, %p69
      %s71 = ssub.s32 %s16, %s23
      %p72 = scmp.eq.s32.totalorder %s71, 0
      %s74 = sadd.s32 %s73, 1
      %s75 = scalar_select %p72, %s73, %s74
      %p78 = pneg %p72
      %p79 = scmp.eq.s32.totalorder %s16, 3
      %p80 = por %p78, %p79
      %p81 = scmp.ne.s32.totalorder %s73, %s76
      %p82 = scmp.eq.s32.totalorder %s16, 0
      %p83 = por %p81, %p82
      %p84 = scmp.ne.s32.totalorder %s73, %s76
      %p85 = scmp.eq.s32.totalorder %s21, 3
      %p86 = por %p84, %p85
      %p87 = scmp.ne.s32.totalorder %s76, %s77
      %p88 = scmp.eq.s32.totalorder %s21, 0
      %p89 = por %p87, %p88
      %p90 = scmp.ne.s32.totalorder %s76, %s77
      %p91 = scmp.eq.s32.totalorder %s22, 3
      %p92 = por %p90, %p91
      %p94 = scmp.ne.s32.totalorder %s77, %s93
      %p95 = scmp.eq.s32.totalorder %s22, 0
      %p96 = por %p94, %p95
      %s97 = ssub.s32 %s16, %s23
      %p98 = scmp.eq.s32.totalorder %s97, 0
      %s100 = sadd.s32 %s99, 1
      %s101 = scalar_select %p98, %s99, %s100
      %p104 = pneg %p98
      %p105 = scmp.eq.s32.totalorder %s16, 3
      %p106 = por %p104, %p105
      %p107 = scmp.ne.s32.totalorder %s99, %s102
      %p108 = scmp.eq.s32.totalorder %s16, 0
      %p109 = por %p107, %p108
      %p110 = scmp.ne.s32.totalorder %s99, %s102
      %p111 = scmp.eq.s32.totalorder %s21, 3
      %p112 = por %p110, %p111
      %p113 = scmp.ne.s32.totalorder %s102, %s103
      %p114 = scmp.eq.s32.totalorder %s21, 0
      %p115 = por %p113, %p114
      %p116 = scmp.ne.s32.totalorder %s102, %s103
      %p117 = scmp.eq.s32.totalorder %s22, 3
      %p118 = por %p116, %p117
      %p120 = scmp.ne.s32.totalorder %s103, %s119
      %p121 = scmp.eq.s32.totalorder %s22, 0
      %p122 = por %p120, %p121
      %p123 = scmp.le.s32.totalorder 1, %s16
      %p124 = scmp.lt.s32.totalorder %s16, 5
      %p125 = pnand %p123, %p124
      %p126 = pneg %p125
      // Predicated region
      $region9: #{tpu_custom_call.1} parent=5 // pred_check
        _
      $region10: #{tpu_custom_call.1} parent=5 // pred_check_branch
        %128 = sbr.rel (%p125) target = $region12
      $region11: #{tpu_custom_call.1} parent=5 // pred_region
        %s129 = ssub.s32 %s16, 1
        // Predicated region
        $region13: #{tpu_custom_call.1} parent=11 // pred_check
          %p130 = pneg %p37
        $region14: #{tpu_custom_call.1} parent=11 // pred_check_branch
          %132 = sbr.rel (%p130) target = $region16
        $region15: #{tpu_custom_call.1} parent=11 // pred_region
          %s134 = ssub.s32 160, 160
          %135 = vsyncadd [#allocation3], %s134
          %s137 = sshll.u32 [#allocation2], 4
          %s138 = int_to_ptr.vmem [resolvable:$true] %s137
          %140 = dma.hbm_to_vmem [thread:$0]  %s0, 160, %s138, [#allocation3]
        $region16: #{tpu_custom_call.1} parent=11 // pred_fallthru
          _
      $region12: #{tpu_custom_call.1} parent=5 // pred_fallthru
        _
      %p141 = scmp.lt.s32.totalorder %s16, 4
      // Predicated region
      $region17: #{tpu_custom_call.1} parent=5 // pred_check
        %p142 = pneg %p141
      $region18: #{tpu_custom_call.1} parent=5 // pred_check_branch
        %144 = sbr.rel (%p142) target = $region20
      $region19: #{tpu_custom_call.1} parent=5 // pred_region
        // Predicated region
        $region21: #{tpu_custom_call.1} parent=19 // pred_check
          %p145 = pneg %p57
        $region22: #{tpu_custom_call.1} parent=19 // pred_check_branch
          %147 = sbr.rel (%p145) target = $region24
        $region23: #{tpu_custom_call.1} parent=19 // pred_region
          %s148 = sand.u32 %s16, 1
          %s149 = scalar_lea.sflag [#allocation6], %s148
          %s150 = sand.u32 %s47, 1
          %s151 = smul.addr %s150, 1280
          %s152 = scalar_lea.vmem [#allocation5], %s151
          %s153 = smul.u32 32, %s16
          %s154 = ssub.s32 98, %s153
          %p155 = scmp.lt.s32.totalorder %s154, 32
          %s156 = scalar_select %p155, %s154, 32
          %s157 = smul.u32 64, %s156
          %s158 = smul.u32 %s157, 10
          %s160 = ssub.s32 20480, %s158
          %161 = vsyncadd %s149, %s160
          %p162 = scmp.ne.s32.totalorder 0, %s158
          %s163 = smul.addr %s153, 10
          %s164 = smul.addr %s163, 64
          %s165 = scalar_lea.hbm %s1, %s164
          %s166 = smul.u32 40, %s156
          %s167 = sshll.u32 %s152, 4
          %s168 = int_to_ptr.vmem [resolvable:$true] %s167
          %s169 = sshll.u32 %s166, 4
          %173 = dma.hbm_to_vmem [thread:$0]  (%p162), %s165, %s169, %s168, %s149, 640, 640, 40
        $region24: #{tpu_custom_call.1} parent=19 // pred_fallthru
          _
        // Predicated region
        $region25: #{tpu_custom_call.1} parent=19 // pred_check
          %p174 = pneg %p83
        $region26: #{tpu_custom_call.1} parent=19 // pred_check_branch
          %176 = sbr.rel (%p174) target = $region28
        $region27: #{tpu_custom_call.1} parent=19 // pred_region
          %s177 = sand.u32 %s16, 1
          %s178 = scalar_lea.sflag [#allocation6], %s177
          %s179 = sand.u32 %s73, 1
          %s180 = smul.addr %s179, 2
          %s181 = scalar_lea.vmem [#allocation7], %s180
          %s182 = smul.u32 2, %s16
          %s183 = ssub.s32 7, %s182
          %p184 = scmp.lt.s32.totalorder %s183, 2
          %s185 = scalar_select %p184, %s183, 2
          %s186 = smul.u32 16, %s185
          %s188 = ssub.s32 32, %s186
          %189 = vsyncadd %s178, %s188
          %p190 = scmp.ne.s32.totalorder 0, %s186
          %s191 = smul.addr %s182, 16
          %s192 = scalar_lea.hbm %s2, %s191
          %s193 = sshll.u32 %s185, 4
          %s194 = sshll.u32 %s181, 4
          %s195 = int_to_ptr.vmem [resolvable:$true] %s194
          %197 = dma.hbm_to_vmem [thread:$0]  (%p190), %s192, %s193, %s195, %s178
        $region28: #{tpu_custom_call.1} parent=19 // pred_fallthru
          _
      $region20: #{tpu_custom_call.1} parent=5 // pred_fallthru
        _
      %p198 = scmp.le.s32.totalorder 1, %s16
      %p199 = scmp.lt.s32.totalorder %s16, 5
      %p200 = pnand %p198, %p199
      %p201 = pneg %p200
      // Predicated region
      $region29: #{tpu_custom_call.1} parent=5 // pred_check
        _
      $region30: #{tpu_custom_call.1} parent=5 // pred_check_branch
        %203 = sbr.rel (%p200) target = $region32
      $region31: #{tpu_custom_call.1} parent=5 // pred_region
        %s204 = ssub.s32 %s16, 1
        // Predicated region
        $region33: #{tpu_custom_call.1} parent=31 // pred_check
          %p205 = pneg %p37
        $region34: #{tpu_custom_call.1} parent=31 // pred_check_branch
          %207 = sbr.rel (%p205) target = $region36
        $region35: #{tpu_custom_call.1} parent=31 // pred_region
          %208 = dma.done [#allocation3], 160
        $region36: #{tpu_custom_call.1} parent=31 // pred_fallthru
          _
        %s209 = sand.u32 %s21, 1
        %s210 = scalar_lea.sflag [#allocation6], %s209
        %s211 = sand.u32 %s50, 1
        %s212 = smul.addr %s211, 1280
        %s213 = scalar_lea.vmem [#allocation5], %s212
        // Predicated region
        $region37: #{tpu_custom_call.1} parent=31 // pred_check
          %p214 = pneg %p63
        $region38: #{tpu_custom_call.1} parent=31 // pred_check_branch
          %216 = sbr.rel (%p214) target = $region40
        $region39: #{tpu_custom_call.1} parent=31 // pred_region
          %217 = dma.done %s210, 20480
        $region40: #{tpu_custom_call.1} parent=31 // pred_fallthru
          _
        %s218 = sand.u32 %s21, 1
        %s219 = scalar_lea.sflag [#allocation6], %s218
        %s220 = sand.u32 %s76, 1
        %s221 = smul.addr %s220, 2
        %s222 = scalar_lea.vmem [#allocation7], %s221
        // Predicated region
        $region41: #{tpu_custom_call.1} parent=31 // pred_check
          %p223 = pneg %p89
        $region42: #{tpu_custom_call.1} parent=31 // pred_check_branch
          %225 = sbr.rel (%p223) target = $region44
        $region43: #{tpu_custom_call.1} parent=31 // pred_region
          %226 = dma.done %s219, 32
        $region44: #{tpu_custom_call.1} parent=31 // pred_fallthru
          _
        %p227 = pneg %p37
        %p228 = pneg %p34
        %s229 = sand.u32 %s21, 1
        %s230 = scalar_lea.sflag [#allocation6], %s229
        %s231 = sand.u32 %s50, 1
        %s232 = smul.addr %s231, 1280
        %s233 = scalar_lea.vmem [#allocation5], %s232
        %p234 = pneg %p63
        %p235 = pneg %p60
        %s236 = sand.u32 %s21, 1
        %s237 = scalar_lea.sflag [#allocation6], %s236
        %s238 = sand.u32 %s76, 1
        %s239 = smul.addr %s238, 2
        %s240 = scalar_lea.vmem [#allocation7], %s239
        %p241 = pneg %p89
        %p242 = pneg %p86
        %p243 = pneg %p115
        %p244 = pneg %p112
        %s245 = sand.u32 %s102, 1
        %s246 = scalar_lea.sflag [#allocation4], %s245
        %s247 = sand.u32 %s102, 1
        %s248 = smul.addr %s247, 4
        %s249 = scalar_lea.vmem [#allocation8], %s248
        %s250 = smul.u32 32, %s21
        %s251 = ssub.s32 98, %s250
        %p252 = scmp.lt.s32.totalorder %s251, 32
        %s253 = scalar_select %p252, %s251, 32
        %s254 = smul.u32 64, %s253
        %s255 = smul.u32 %s254, 10
        %s256 = smul.u32 2, %s21
        %s257 = ssub.s32 7, %s256
        %p258 = scmp.lt.s32.totalorder %s257, 2
        %s259 = scalar_select %p258, %s257, 2
        %s260 = smul.u32 16, %s259
        %s261 = smul.u32 2, %s21
        %s262 = ssub.s32 7, %s261
        %p263 = scmp.lt.s32.totalorder %s262, 2
        %s264 = scalar_select %p263, %s262, 2
        %s265 = smul.u32 32, %s264
        %v266 = vld [vmem:[#allocation2] sm:$0xff]
        %v267 = vld [vmem:[#allocation2 + $0x8] sm:$0x3]
        %v268 = vld [vmem:[%s213] sm:$0xff]
        %v269 = vld [vmem:[%s213 + $0x8] sm:$0xff]
        %v270 = vld [vmem:[%s213 + $0x10] sm:$0xff]
        %v271 = vld [vmem:[%s213 + $0x18] sm:$0xff]
        %v272 = vld [vmem:[%s213 + $0x20] sm:$0xff]
        %v273 = vld [vmem:[%s213 + $0x28] sm:$0xff]
        %v274 = vld [vmem:[%s213 + $0x30] sm:$0xff]
        %v275 = vld [vmem:[%s213 + $0x38] sm:$0xff]
        %v276 = vld [vmem:[%s213 + $0x40] sm:$0xff]
        %v277 = vld [vmem:[%s213 + $0x48] sm:$0xff]
        %v278 = vld [vmem:[%s213 + $0x50] sm:$0xff]
        %v279 = vld [vmem:[%s213 + $0x58] sm:$0xff]
        %v280 = vld [vmem:[%s213 + $0x60] sm:$0xff]
        %v281 = vld [vmem:[%s213 + $0x68] sm:$0xff]
        %v282 = vld [vmem:[%s213 + $0x70] sm:$0xff]
        %v283 = vld [vmem:[%s213 + $0x78] sm:$0xff]
        %v284 = vld [vmem:[%s213 + $0x80] sm:$0xff]
        %v285 = vld [vmem:[%s213 + $0x88] sm:$0xff]
        %v286 = vld [vmem:[%s213 + $0x90] sm:$0xff]
        %v287 = vld [vmem:[%s213 + $0x98] sm:$0xff]
        %v288 = vld [vmem:[%s213 + $0xa0] sm:$0xff]
        %v289 = vld [vmem:[%s213 + $0xa8] sm:$0xff]
        %v290 = vld [vmem:[%s213 + $0xb0] sm:$0xff]
        %v291 = vld [vmem:[%s213 + $0xb8] sm:$0xff]
        %v292 = vld [vmem:[%s213 + $0xc0] sm:$0xff]
        %v293 = vld [vmem:[%s213 + $0xc8] sm:$0xff]
        %v294 = vld [vmem:[%s213 + $0xd0] sm:$0xff]
        %v295 = vld [vmem:[%s213 + $0xd8] sm:$0xff]
        %v296 = vld [vmem:[%s213 + $0xe0] sm:$0xff]
        %v297 = vld [vmem:[%s213 + $0xe8] sm:$0xff]
        %v298 = vld [vmem:[%s213 + $0xf0] sm:$0xff]
        %v299 = vld [vmem:[%s213 + $0xf8] sm:$0xff]
        %v300 = vld [vmem:[%s213 + $0x100] sm:$0xff]
        %v301 = vld [vmem:[%s213 + $0x108] sm:$0xff]
        %v302 = vld [vmem:[%s213 + $0x110] sm:$0xff]
        %v303 = vld [vmem:[%s213 + $0x118] sm:$0xff]
        %v304 = vld [vmem:[%s213 + $0x120] sm:$0xff]
        %v305 = vld [vmem:[%s213 + $0x128] sm:$0xff]
        %v306 = vld [vmem:[%s213 + $0x130] sm:$0xff]
        %v307 = vld [vmem:[%s213 + $0x138] sm:$0xff]
        %v308 = vld [vmem:[%s213 + $0x140] sm:$0xff]
        %v309 = vld [vmem:[%s213 + $0x148] sm:$0xff]
        %v310 = vld [vmem:[%s213 + $0x150] sm:$0xff]
        %v311 = vld [vmem:[%s213 + $0x158] sm:$0xff]
        %v312 = vld [vmem:[%s213 + $0x160] sm:$0xff]
        %v313 = vld [vmem:[%s213 + $0x168] sm:$0xff]
        %v314 = vld [vmem:[%s213 + $0x170] sm:$0xff]
        %v315 = vld [vmem:[%s213 + $0x178] sm:$0xff]
        %v316 = vld [vmem:[%s213 + $0x180] sm:$0xff]
        %v317 = vld [vmem:[%s213 + $0x188] sm:$0xff]
        %v318 = vld [vmem:[%s213 + $0x190] sm:$0xff]
        %v319 = vld [vmem:[%s213 + $0x198] sm:$0xff]
        %v320 = vld [vmem:[%s213 + $0x1a0] sm:$0xff]
        %v321 = vld [vmem:[%s213 + $0x1a8] sm:$0xff]
        %v322 = vld [vmem:[%s213 + $0x1b0] sm:$0xff]
        %v323 = vld [vmem:[%s213 + $0x1b8] sm:$0xff]
        %v324 = vld [vmem:[%s213 + $0x1c0] sm:$0xff]
        %v325 = vld [vmem:[%s213 + $0x1c8] sm:$0xff]
        %v326 = vld [vmem:[%s213 + $0x1d0] sm:$0xff]
        %v327 = vld [vmem:[%s213 + $0x1d8] sm:$0xff]
        %v328 = vld [vmem:[%s213 + $0x1e0] sm:$0xff]
        %v329 = vld [vmem:[%s213 + $0x1e8] sm:$0xff]
        %v330 = vld [vmem:[%s213 + $0x1f0] sm:$0xff]
        %v331 = vld [vmem:[%s213 + $0x1f8] sm:$0xff]
        %v332 = vld [vmem:[%s213 + $0x200] sm:$0xff]
        %v333 = vld [vmem:[%s213 + $0x208] sm:$0xff]
        %v334 = vld [vmem:[%s213 + $0x210] sm:$0xff]
        %v335 = vld [vmem:[%s213 + $0x218] sm:$0xff]
        %v336 = vld [vmem:[%s213 + $0x220] sm:$0xff]
        %v337 = vld [vmem:[%s213 + $0x228] sm:$0xff]
        %v338 = vld [vmem:[%s213 + $0x230] sm:$0xff]
        %v339 = vld [vmem:[%s213 + $0x238] sm:$0xff]
        %v340 = vld [vmem:[%s213 + $0x240] sm:$0xff]
        %v341 = vld [vmem:[%s213 + $0x248] sm:$0xff]
        %v342 = vld [vmem:[%s213 + $0x250] sm:$0xff]
        %v343 = vld [vmem:[%s213 + $0x258] sm:$0xff]
        %v344 = vld [vmem:[%s213 + $0x260] sm:$0xff]
        %v345 = vld [vmem:[%s213 + $0x268] sm:$0xff]
        %v346 = vld [vmem:[%s213 + $0x270] sm:$0xff]
        %v347 = vld [vmem:[%s213 + $0x278] sm:$0xff]
        %v348 = vld [vmem:[%s213 + $0x280] sm:$0xff]
        %v349 = vld [vmem:[%s213 + $0x288] sm:$0xff]
        %v350 = vld [vmem:[%s213 + $0x290] sm:$0xff]
        %v351 = vld [vmem:[%s213 + $0x298] sm:$0xff]
        %v352 = vld [vmem:[%s213 + $0x2a0] sm:$0xff]
        %v353 = vld [vmem:[%s213 + $0x2a8] sm:$0xff]
        %v354 = vld [vmem:[%s213 + $0x2b0] sm:$0xff]
        %v355 = vld [vmem:[%s213 + $0x2b8] sm:$0xff]
        %v356 = vld [vmem:[%s213 + $0x2c0] sm:$0xff]
        %v357 = vld [vmem:[%s213 + $0x2c8] sm:$0xff]
        %v358 = vld [vmem:[%s213 + $0x2d0] sm:$0xff]
        %v359 = vld [vmem:[%s213 + $0x2d8] sm:$0xff]
        %v360 = vld [vmem:[%s213 + $0x2e0] sm:$0xff]
        %v361 = vld [vmem:[%s213 + $0x2e8] sm:$0xff]
        %v362 = vld [vmem:[%s213 + $0x2f0] sm:$0xff]
        %v363 = vld [vmem:[%s213 + $0x2f8] sm:$0xff]
        %v364 = vld [vmem:[%s213 + $0x300] sm:$0xff]
        %v365 = vld [vmem:[%s213 + $0x308] sm:$0xff]
        %v366 = vld [vmem:[%s213 + $0x310] sm:$0xff]
        %v367 = vld [vmem:[%s213 + $0x318] sm:$0xff]
        %v368 = vld [vmem:[%s213 + $0x320] sm:$0xff]
        %v369 = vld [vmem:[%s213 + $0x328] sm:$0xff]
        %v370 = vld [vmem:[%s213 + $0x330] sm:$0xff]
        %v371 = vld [vmem:[%s213 + $0x338] sm:$0xff]
        %v372 = vld [vmem:[%s213 + $0x340] sm:$0xff]
        %v373 = vld [vmem:[%s213 + $0x348] sm:$0xff]
        %v374 = vld [vmem:[%s213 + $0x350] sm:$0xff]
        %v375 = vld [vmem:[%s213 + $0x358] sm:$0xff]
        %v376 = vld [vmem:[%s213 + $0x360] sm:$0xff]
        %v377 = vld [vmem:[%s213 + $0x368] sm:$0xff]
        %v378 = vld [vmem:[%s213 + $0x370] sm:$0xff]
        %v379 = vld [vmem:[%s213 + $0x378] sm:$0xff]
        %v380 = vld [vmem:[%s213 + $0x380] sm:$0xff]
        %v381 = vld [vmem:[%s213 + $0x388] sm:$0xff]
        %v382 = vld [vmem:[%s213 + $0x390] sm:$0xff]
        %v383 = vld [vmem:[%s213 + $0x398] sm:$0xff]
        %v384 = vld [vmem:[%s213 + $0x3a0] sm:$0xff]
        %v385 = vld [vmem:[%s213 + $0x3a8] sm:$0xff]
        %v386 = vld [vmem:[%s213 + $0x3b0] sm:$0xff]
        %v387 = vld [vmem:[%s213 + $0x3b8] sm:$0xff]
        %v388 = vld [vmem:[%s213 + $0x3c0] sm:$0xff]
        %v389 = vld [vmem:[%s213 + $0x3c8] sm:$0xff]
        %v390 = vld [vmem:[%s213 + $0x3d0] sm:$0xff]
        %v391 = vld [vmem:[%s213 + $0x3d8] sm:$0xff]
        %v392 = vld [vmem:[%s213 + $0x3e0] sm:$0xff]
        %v393 = vld [vmem:[%s213 + $0x3e8] sm:$0xff]
        %v394 = vld [vmem:[%s213 + $0x3f0] sm:$0xff]
        %v395 = vld [vmem:[%s213 + $0x3f8] sm:$0xff]
        %v396 = vld [vmem:[%s213 + $0x400] sm:$0xff]
        %v397 = vld [vmem:[%s213 + $0x408] sm:$0xff]
        %v398 = vld [vmem:[%s213 + $0x410] sm:$0xff]
        %v399 = vld [vmem:[%s213 + $0x418] sm:$0xff]
        %v400 = vld [vmem:[%s213 + $0x420] sm:$0xff]
        %v401 = vld [vmem:[%s213 + $0x428] sm:$0xff]
        %v402 = vld [vmem:[%s213 + $0x430] sm:$0xff]
        %v403 = vld [vmem:[%s213 + $0x438] sm:$0xff]
        %v404 = vld [vmem:[%s213 + $0x440] sm:$0xff]
        %v405 = vld [vmem:[%s213 + $0x448] sm:$0xff]
        %v406 = vld [vmem:[%s213 + $0x450] sm:$0xff]
        %v407 = vld [vmem:[%s213 + $0x458] sm:$0xff]
        %v408 = vld [vmem:[%s213 + $0x460] sm:$0xff]
        %v409 = vld [vmem:[%s213 + $0x468] sm:$0xff]
        %v410 = vld [vmem:[%s213 + $0x470] sm:$0xff]
        %v411 = vld [vmem:[%s213 + $0x478] sm:$0xff]
        %v412 = vld [vmem:[%s213 + $0x480] sm:$0xff]
        %v413 = vld [vmem:[%s213 + $0x488] sm:$0xff]
        %v414 = vld [vmem:[%s213 + $0x490] sm:$0xff]
        %v415 = vld [vmem:[%s213 + $0x498] sm:$0xff]
        %v416 = vld [vmem:[%s213 + $0x4a0] sm:$0xff]
        %v417 = vld [vmem:[%s213 + $0x4a8] sm:$0xff]
        %v418 = vld [vmem:[%s213 + $0x4b0] sm:$0xff]
        %v419 = vld [vmem:[%s213 + $0x4b8] sm:$0xff]
        %v420 = vld [vmem:[%s213 + $0x4c0] sm:$0xff]
        %v421 = vld [vmem:[%s213 + $0x4c8] sm:$0xff]
        %v422 = vld [vmem:[%s213 + $0x4d0] sm:$0xff]
        %v423 = vld [vmem:[%s213 + $0x4d8] sm:$0xff]
        %v424 = vld [vmem:[%s213 + $0x4e0] sm:$0xff]
        %v425 = vld [vmem:[%s213 + $0x4e8] sm:$0xff]
        %v426 = vld [vmem:[%s213 + $0x4f0] sm:$0xff]
        %v427 = vld [vmem:[%s213 + $0x4f8] sm:$0xff]
        %v428 = vld [vmem:[%s222] sm:$0x3]
        %v430 = vlaneseq
        %v431 = vshrl.u32 %v430, 7
        %v432 = vsub.s32 0, %v431
        %v433 = vrot.slane %v428, %v432
        %v434 = vlaneseq
        %v435 = vshrl.u32 %v434, 7
        %v436 = vsub.s32 1, %v435
        %v437 = vrot.slane %v428, %v436
        %v442 = vcombine.high %v266, %v266
        %v444 = vunpack.c.l.s4 1966171168
        %v445 = vunpack.c.0.s8 %v444
        %v446 = vlaneseq
        %v447 = vshrl.u32 %v446, 7
        %v448 = vsub.s32 %v445, %v447
        %v449 = vrot.slane %v266, %v448
        %v451 = vunpack.c.l.s4 1966171168
        %v452 = vunpack.c.0.s8 %v451
        %v453 = vlaneseq
        %v454 = vshrl.u32 %v453, 7
        %v455 = vsub.s32 %v452, %v454
        %v456 = vrot.slane %v442, %v455
        %v457 = vcombine.high %v449, %v449
        %v458 = vcombine.high %v456, %v456
        %v460 = vunpack.c.l.s4 1966171168
        %v461 = vunpack.c.0.s8 %v460
        %v462 = vlaneseq
        %v463 = vshrl.u32 %v462, 7
        %v464 = vsub.s32 %v461, %v463
        %v465 = vrot.slane %v449, %v464
        %v467 = vunpack.c.l.s4 1966171168
        %v468 = vunpack.c.0.s8 %v467
        %v469 = vlaneseq
        %v470 = vshrl.u32 %v469, 7
        %v471 = vsub.s32 %v468, %v470
        %v472 = vrot.slane %v456, %v471
        %v474 = vunpack.c.l.s4 1966171168
        %v475 = vunpack.c.0.s8 %v474
        %v476 = vlaneseq
        %v477 = vshrl.u32 %v476, 7
        %v478 = vsub.s32 %v475, %v477
        %v479 = vrot.slane %v457, %v478
        %v481 = vunpack.c.l.s4 1966171168
        %v482 = vunpack.c.0.s8 %v481
        %v483 = vlaneseq
        %v484 = vshrl.u32 %v483, 7
        %v485 = vsub.s32 %v482, %v484
        %v486 = vrot.slane %v458, %v485
        %v487 = vcombine.high %v465, %v465
        %v488 = vcombine.high %v472, %v472
        %v489 = vcombine.high %v479, %v479
        %v490 = vcombine.high %v486, %v486
        %v492 = vunpack.c.l.s4 1966171168
        %v493 = vunpack.c.0.s8 %v492
        %v494 = vlaneseq
        %v495 = vshrl.u32 %v494, 7
        %v496 = vsub.s32 %v493, %v495
        %v497 = vrot.slane %v267, %v496
        %v498 = vcombine.high %v497, %v497
        %v500 = vunpack.c.l.s4 1966171168
        %v501 = vunpack.c.0.s8 %v500
        %v502 = vlaneseq
        %v503 = vshrl.u32 %v502, 7
        %v504 = vsub.s32 %v501, %v503
        %v505 = vrot.slane %v497, %v504
        %v507 = vunpack.c.l.s4 1966171168
        %v508 = vunpack.c.0.s8 %v507
        %v509 = vlaneseq
        %v510 = vshrl.u32 %v509, 7
        %v511 = vsub.s32 %v508, %v510
        %v512 = vrot.slane %v498, %v511
        %v683 = vunpack.c.l.b16 %v268
        %v684 = vunpack.c.h.b16 %v268
        %v685 = vunpack.c.l.b16 %v269
        %v686 = vunpack.c.h.b16 %v269
        %v687 = vunpack.c.l.b16 %v270
        %v688 = vunpack.c.h.b16 %v270
        %v689 = vunpack.c.l.b16 %v271
        %v690 = vunpack.c.h.b16 %v271
        %v691 = vunpack.c.l.b16 %v272
        %v692 = vunpack.c.h.b16 %v272
        %v693 = vunpack.c.l.b16 %v273
        %v694 = vunpack.c.h.b16 %v273
        %v695 = vunpack.c.l.b16 %v274
        %v696 = vunpack.c.h.b16 %v274
        %v697 = vunpack.c.l.b16 %v275
        %v698 = vunpack.c.h.b16 %v275
        %v699 = vunpack.c.l.b16 %v276
        %v700 = vunpack.c.h.b16 %v276
        %v701 = vunpack.c.l.b16 %v277
        %v702 = vunpack.c.h.b16 %v277
        %v703 = vunpack.c.l.b16 %v278
        %v704 = vunpack.c.h.b16 %v278
        %v705 = vunpack.c.l.b16 %v279
        %v706 = vunpack.c.h.b16 %v279
        %v707 = vunpack.c.l.b16 %v280
        %v708 = vunpack.c.h.b16 %v280
        %v709 = vunpack.c.l.b16 %v281
        %v710 = vunpack.c.h.b16 %v281
        %v711 = vunpack.c.l.b16 %v282
        %v712 = vunpack.c.h.b16 %v282
        %v713 = vunpack.c.l.b16 %v283
        %v714 = vunpack.c.h.b16 %v283
        %v715 = vunpack.c.l.b16 %v284
        %v716 = vunpack.c.h.b16 %v284
        %v717 = vunpack.c.l.b16 %v285
        %v718 = vunpack.c.h.b16 %v285
        %v719 = vunpack.c.l.b16 %v286
        %v720 = vunpack.c.h.b16 %v286
        %v721 = vunpack.c.l.b16 %v287
        %v722 = vunpack.c.h.b16 %v287
        %v723 = vunpack.c.l.b16 %v288
        %v724 = vunpack.c.h.b16 %v288
        %v725 = vunpack.c.l.b16 %v289
        %v726 = vunpack.c.h.b16 %v289
        %v727 = vunpack.c.l.b16 %v290
        %v728 = vunpack.c.h.b16 %v290
        %v729 = vunpack.c.l.b16 %v291
        %v730 = vunpack.c.h.b16 %v291
        %v731 = vunpack.c.l.b16 %v292
        %v732 = vunpack.c.h.b16 %v292
        %v733 = vunpack.c.l.b16 %v293
        %v734 = vunpack.c.h.b16 %v293
        %v735 = vunpack.c.l.b16 %v294
        %v736 = vunpack.c.h.b16 %v294
        %v737 = vunpack.c.l.b16 %v295
        %v738 = vunpack.c.h.b16 %v295
        %v739 = vunpack.c.l.b16 %v296
        %v740 = vunpack.c.h.b16 %v296
        %v741 = vunpack.c.l.b16 %v297
        %v742 = vunpack.c.h.b16 %v297
        %v743 = vunpack.c.l.b16 %v298
        %v744 = vunpack.c.h.b16 %v298
        %v745 = vunpack.c.l.b16 %v299
        %v746 = vunpack.c.h.b16 %v299
        %v747 = vunpack.c.l.b16 %v300
        %v748 = vunpack.c.h.b16 %v300
        %v749 = vunpack.c.l.b16 %v301
        %v750 = vunpack.c.h.b16 %v301
        %v751 = vunpack.c.l.b16 %v302
        %v752 = vunpack.c.h.b16 %v302
        %v753 = vunpack.c.l.b16 %v303
        %v754 = vunpack.c.h.b16 %v303
        %v755 = vunpack.c.l.b16 %v304
        %v756 = vunpack.c.h.b16 %v304
        %v757 = vunpack.c.l.b16 %v305
        %v758 = vunpack.c.h.b16 %v305
        %v759 = vunpack.c.l.b16 %v306
        %v760 = vunpack.c.h.b16 %v306
        %v761 = vunpack.c.l.b16 %v307
        %v762 = vunpack.c.h.b16 %v307
        %v763 = vunpack.c.l.b16 %v308
        %v764 = vunpack.c.h.b16 %v308
        %v765 = vunpack.c.l.b16 %v309
        %v766 = vunpack.c.h.b16 %v309
        %v767 = vunpack.c.l.b16 %v310
        %v768 = vunpack.c.h.b16 %v310
        %v769 = vunpack.c.l.b16 %v311
        %v770 = vunpack.c.h.b16 %v311
        %v771 = vunpack.c.l.b16 %v312
        %v772 = vunpack.c.h.b16 %v312
        %v773 = vunpack.c.l.b16 %v313
        %v774 = vunpack.c.h.b16 %v313
        %v775 = vunpack.c.l.b16 %v314
        %v776 = vunpack.c.h.b16 %v314
        %v777 = vunpack.c.l.b16 %v315
        %v778 = vunpack.c.h.b16 %v315
        %v779 = vunpack.c.l.b16 %v316
        %v780 = vunpack.c.h.b16 %v316
        %v781 = vunpack.c.l.b16 %v317
        %v782 = vunpack.c.h.b16 %v317
        %v783 = vunpack.c.l.b16 %v318
        %v784 = vunpack.c.h.b16 %v318
        %v785 = vunpack.c.l.b16 %v319
        %v786 = vunpack.c.h.b16 %v319
        %v787 = vunpack.c.l.b16 %v320
        %v788 = vunpack.c.h.b16 %v320
        %v789 = vunpack.c.l.b16 %v321
        %v790 = vunpack.c.h.b16 %v321
        %v791 = vunpack.c.l.b16 %v322
        %v792 = vunpack.c.h.b16 %v322
        %v793 = vunpack.c.l.b16 %v323
        %v794 = vunpack.c.h.b16 %v323
        %v795 = vunpack.c.l.b16 %v324
        %v796 = vunpack.c.h.b16 %v324
        %v797 = vunpack.c.l.b16 %v325
        %v798 = vunpack.c.h.b16 %v325
        %v799 = vunpack.c.l.b16 %v326
        %v800 = vunpack.c.h.b16 %v326
        %v801 = vunpack.c.l.b16 %v327
        %v802 = vunpack.c.h.b16 %v327
        %v803 = vunpack.c.l.b16 %v328
        %v804 = vunpack.c.h.b16 %v328
        %v805 = vunpack.c.l.b16 %v329
        %v806 = vunpack.c.h.b16 %v329
        %v807 = vunpack.c.l.b16 %v330
        %v808 = vunpack.c.h.b16 %v330
        %v809 = vunpack.c.l.b16 %v331
        %v810 = vunpack.c.h.b16 %v331
        %v811 = vunpack.c.l.b16 %v332
        %v812 = vunpack.c.h.b16 %v332
        %v813 = vunpack.c.l.b16 %v333
        %v814 = vunpack.c.h.b16 %v333
        %v815 = vunpack.c.l.b16 %v334
        %v816 = vunpack.c.h.b16 %v334
        %v817 = vunpack.c.l.b16 %v335
        %v818 = vunpack.c.h.b16 %v335
        %v819 = vunpack.c.l.b16 %v336
        %v820 = vunpack.c.h.b16 %v336
        %v821 = vunpack.c.l.b16 %v337
        %v822 = vunpack.c.h.b16 %v337
        %v823 = vunpack.c.l.b16 %v338
        %v824 = vunpack.c.h.b16 %v338
        %v825 = vunpack.c.l.b16 %v339
        %v826 = vunpack.c.h.b16 %v339
        %v827 = vunpack.c.l.b16 %v340
        %v828 = vunpack.c.h.b16 %v340
        %v829 = vunpack.c.l.b16 %v341
        %v830 = vunpack.c.h.b16 %v341
        %v831 = vunpack.c.l.b16 %v342
        %v832 = vunpack.c.h.b16 %v342
        %v833 = vunpack.c.l.b16 %v343
        %v834 = vunpack.c.h.b16 %v343
        %v835 = vunpack.c.l.b16 %v344
        %v836 = vunpack.c.h.b16 %v344
        %v837 = vunpack.c.l.b16 %v345
        %v838 = vunpack.c.h.b16 %v345
        %v839 = vunpack.c.l.b16 %v346
        %v840 = vunpack.c.h.b16 %v346
        %v841 = vunpack.c.l.b16 %v347
        %v842 = vunpack.c.h.b16 %v347
        %v843 = vunpack.c.l.b16 %v348
        %v844 = vunpack.c.h.b16 %v348
        %v845 = vunpack.c.l.b16 %v349
        %v846 = vunpack.c.h.b16 %v349
        %v847 = vunpack.c.l.b16 %v350
        %v848 = vunpack.c.h.b16 %v350
        %v849 = vunpack.c.l.b16 %v351
        %v850 = vunpack.c.h.b16 %v351
        %v851 = vunpack.c.l.b16 %v352
        %v852 = vunpack.c.h.b16 %v352
        %v853 = vunpack.c.l.b16 %v353
        %v854 = vunpack.c.h.b16 %v353
        %v855 = vunpack.c.l.b16 %v354
        %v856 = vunpack.c.h.b16 %v354
        %v857 = vunpack.c.l.b16 %v355
        %v858 = vunpack.c.h.b16 %v355
        %v859 = vunpack.c.l.b16 %v356
        %v860 = vunpack.c.h.b16 %v356
        %v861 = vunpack.c.l.b16 %v357
        %v862 = vunpack.c.h.b16 %v357
        %v863 = vunpack.c.l.b16 %v358
        %v864 = vunpack.c.h.b16 %v358
        %v865 = vunpack.c.l.b16 %v359
        %v866 = vunpack.c.h.b16 %v359
        %v867 = vunpack.c.l.b16 %v360
        %v868 = vunpack.c.h.b16 %v360
        %v869 = vunpack.c.l.b16 %v361
        %v870 = vunpack.c.h.b16 %v361
        %v871 = vunpack.c.l.b16 %v362
        %v872 = vunpack.c.h.b16 %v362
        %v873 = vunpack.c.l.b16 %v363
        %v874 = vunpack.c.h.b16 %v363
        %v875 = vunpack.c.l.b16 %v364
        %v876 = vunpack.c.h.b16 %v364
        %v877 = vunpack.c.l.b16 %v365
        %v878 = vunpack.c.h.b16 %v365
        %v879 = vunpack.c.l.b16 %v366
        %v880 = vunpack.c.h.b16 %v366
        %v881 = vunpack.c.l.b16 %v367
        %v882 = vunpack.c.h.b16 %v367
        %v883 = vunpack.c.l.b16 %v368
        %v884 = vunpack.c.h.b16 %v368
        %v885 = vunpack.c.l.b16 %v369
        %v886 = vunpack.c.h.b16 %v369
        %v887 = vunpack.c.l.b16 %v370
        %v888 = vunpack.c.h.b16 %v370
        %v889 = vunpack.c.l.b16 %v371
        %v890 = vunpack.c.h.b16 %v371
        %v891 = vunpack.c.l.b16 %v372
        %v892 = vunpack.c.h.b16 %v372
        %v893 = vunpack.c.l.b16 %v373
        %v894 = vunpack.c.h.b16 %v373
        %v895 = vunpack.c.l.b16 %v374
        %v896 = vunpack.c.h.b16 %v374
        %v897 = vunpack.c.l.b16 %v375
        %v898 = vunpack.c.h.b16 %v375
        %v899 = vunpack.c.l.b16 %v376
        %v900 = vunpack.c.h.b16 %v376
        %v901 = vunpack.c.l.b16 %v377
        %v902 = vunpack.c.h.b16 %v377
        %v903 = vunpack.c.l.b16 %v378
        %v904 = vunpack.c.h.b16 %v378
        %v905 = vunpack.c.l.b16 %v379
        %v906 = vunpack.c.h.b16 %v379
        %v907 = vunpack.c.l.b16 %v380
        %v908 = vunpack.c.h.b16 %v380
        %v909 = vunpack.c.l.b16 %v381
        %v910 = vunpack.c.h.b16 %v381
        %v911 = vunpack.c.l.b16 %v382
        %v912 = vunpack.c.h.b16 %v382
        %v913 = vunpack.c.l.b16 %v383
        %v914 = vunpack.c.h.b16 %v383
        %v915 = vunpack.c.l.b16 %v384
        %v916 = vunpack.c.h.b16 %v384
        %v917 = vunpack.c.l.b16 %v385
        %v918 = vunpack.c.h.b16 %v385
        %v919 = vunpack.c.l.b16 %v386
        %v920 = vunpack.c.h.b16 %v386
        %v921 = vunpack.c.l.b16 %v387
        %v922 = vunpack.c.h.b16 %v387
        %v923 = vunpack.c.l.b16 %v388
        %v924 = vunpack.c.h.b16 %v388
        %v925 = vunpack.c.l.b16 %v389
        %v926 = vunpack.c.h.b16 %v389
        %v927 = vunpack.c.l.b16 %v390
        %v928 = vunpack.c.h.b16 %v390
        %v929 = vunpack.c.l.b16 %v391
        %v930 = vunpack.c.h.b16 %v391
        %v931 = vunpack.c.l.b16 %v392
        %v932 = vunpack.c.h.b16 %v392
        %v933 = vunpack.c.l.b16 %v393
        %v934 = vunpack.c.h.b16 %v393
        %v935 = vunpack.c.l.b16 %v394
        %v936 = vunpack.c.h.b16 %v394
        %v937 = vunpack.c.l.b16 %v395
        %v938 = vunpack.c.h.b16 %v395
        %v939 = vunpack.c.l.b16 %v396
        %v940 = vunpack.c.h.b16 %v396
        %v941 = vunpack.c.l.b16 %v397
        %v942 = vunpack.c.h.b16 %v397
        %v943 = vunpack.c.l.b16 %v398
        %v944 = vunpack.c.h.b16 %v398
        %v945 = vunpack.c.l.b16 %v399
        %v946 = vunpack.c.h.b16 %v399
        %v947 = vunpack.c.l.b16 %v400
        %v948 = vunpack.c.h.b16 %v400
        %v949 = vunpack.c.l.b16 %v401
        %v950 = vunpack.c.h.b16 %v401
        %v951 = vunpack.c.l.b16 %v402
        %v952 = vunpack.c.h.b16 %v402
        %v953 = vunpack.c.l.b16 %v403
        %v954 = vunpack.c.h.b16 %v403
        %v955 = vunpack.c.l.b16 %v404
        %v956 = vunpack.c.h.b16 %v404
        %v957 = vunpack.c.l.b16 %v405
        %v958 = vunpack.c.h.b16 %v405
        %v959 = vunpack.c.l.b16 %v406
        %v960 = vunpack.c.h.b16 %v406
        %v961 = vunpack.c.l.b16 %v407
        %v962 = vunpack.c.h.b16 %v407
        %v963 = vunpack.c.l.b16 %v408
        %v964 = vunpack.c.h.b16 %v408
        %v965 = vunpack.c.l.b16 %v409
        %v966 = vunpack.c.h.b16 %v409
        %v967 = vunpack.c.l.b16 %v410
        %v968 = vunpack.c.h.b16 %v410
        %v969 = vunpack.c.l.b16 %v411
        %v970 = vunpack.c.h.b16 %v411
        %v971 = vunpack.c.l.b16 %v412
        %v972 = vunpack.c.h.b16 %v412
        %v973 = vunpack.c.l.b16 %v413
        %v974 = vunpack.c.h.b16 %v413
        %v975 = vunpack.c.l.b16 %v414
        %v976 = vunpack.c.h.b16 %v414
        %v977 = vunpack.c.l.b16 %v415
        %v978 = vunpack.c.h.b16 %v415
        %v979 = vunpack.c.l.b16 %v416
        %v980 = vunpack.c.h.b16 %v416
        %v981 = vunpack.c.l.b16 %v417
        %v982 = vunpack.c.h.b16 %v417
        %v983 = vunpack.c.l.b16 %v418
        %v984 = vunpack.c.h.b16 %v418
        %v985 = vunpack.c.l.b16 %v419
        %v986 = vunpack.c.h.b16 %v419
        %v987 = vunpack.c.l.b16 %v420
        %v988 = vunpack.c.h.b16 %v420
        %v989 = vunpack.c.l.b16 %v421
        %v990 = vunpack.c.h.b16 %v421
        %v991 = vunpack.c.l.b16 %v422
        %v992 = vunpack.c.h.b16 %v422
        %v993 = vunpack.c.l.b16 %v423
        %v994 = vunpack.c.h.b16 %v423
        %v995 = vunpack.c.l.b16 %v424
        %v996 = vunpack.c.h.b16 %v424
        %v997 = vunpack.c.l.b16 %v425
        %v998 = vunpack.c.h.b16 %v425
        %v999 = vunpack.c.l.b16 %v426
        %v1000 = vunpack.c.h.b16 %v426
        %v1001 = vunpack.c.l.b16 %v427
        %v1002 = vunpack.c.h.b16 %v427
        %v1003 = vpack.c.b16 %v693, %v683
        %v1004 = vpack.c.b16 %v694, %v684
        %v1005 = vpack.c.b16 %v695, %v685
        %v1006 = vpack.c.b16 %v696, %v686
        %v1007 = vpack.c.b16 %v697, %v687
        %v1008 = vpack.c.b16 %v698, %v688
        %v1009 = vpack.c.b16 %v699, %v689
        %v1010 = vpack.c.b16 %v700, %v690
        %v1011 = vpack.c.b16 %v701, %v691
        %v1012 = vpack.c.b16 %v702, %v692
        %v1013 = vpack.c.b16 %v713, %v703
        %v1014 = vpack.c.b16 %v714, %v704
        %v1015 = vpack.c.b16 %v715, %v705
        %v1016 = vpack.c.b16 %v716, %v706
        %v1017 = vpack.c.b16 %v717, %v707
        %v1018 = vpack.c.b16 %v718, %v708
        %v1019 = vpack.c.b16 %v719, %v709
        %v1020 = vpack.c.b16 %v720, %v710
        %v1021 = vpack.c.b16 %v721, %v711
        %v1022 = vpack.c.b16 %v722, %v712
        %v1023 = vpack.c.b16 %v733, %v723
        %v1024 = vpack.c.b16 %v734, %v724
        %v1025 = vpack.c.b16 %v735, %v725
        %v1026 = vpack.c.b16 %v736, %v726
        %v1027 = vpack.c.b16 %v737, %v727
        %v1028 = vpack.c.b16 %v738, %v728
        %v1029 = vpack.c.b16 %v739, %v729
        %v1030 = vpack.c.b16 %v740, %v730
        %v1031 = vpack.c.b16 %v741, %v731
        %v1032 = vpack.c.b16 %v742, %v732
        %v1033 = vpack.c.b16 %v753, %v743
        %v1034 = vpack.c.b16 %v754, %v744
        %v1035 = vpack.c.b16 %v755, %v745
        %v1036 = vpack.c.b16 %v756, %v746
        %v1037 = vpack.c.b16 %v757, %v747
        %v1038 = vpack.c.b16 %v758, %v748
        %v1039 = vpack.c.b16 %v759, %v749
        %v1040 = vpack.c.b16 %v760, %v750
        %v1041 = vpack.c.b16 %v761, %v751
        %v1042 = vpack.c.b16 %v762, %v752
        %v1043 = vpack.c.b16 %v773, %v763
        %v1044 = vpack.c.b16 %v774, %v764
        %v1045 = vpack.c.b16 %v775, %v765
        %v1046 = vpack.c.b16 %v776, %v766
        %v1047 = vpack.c.b16 %v777, %v767
        %v1048 = vpack.c.b16 %v778, %v768
        %v1049 = vpack.c.b16 %v779, %v769
        %v1050 = vpack.c.b16 %v780, %v770
        %v1051 = vpack.c.b16 %v781, %v771
        %v1052 = vpack.c.b16 %v782, %v772
        %v1053 = vpack.c.b16 %v793, %v783
        %v1054 = vpack.c.b16 %v794, %v784
        %v1055 = vpack.c.b16 %v795, %v785
        %v1056 = vpack.c.b16 %v796, %v786
        %v1057 = vpack.c.b16 %v797, %v787
        %v1058 = vpack.c.b16 %v798, %v788
        %v1059 = vpack.c.b16 %v799, %v789
        %v1060 = vpack.c.b16 %v800, %v790
        %v1061 = vpack.c.b16 %v801, %v791
        %v1062 = vpack.c.b16 %v802, %v792
        %v1063 = vpack.c.b16 %v813, %v803
        %v1064 = vpack.c.b16 %v814, %v804
        %v1065 = vpack.c.b16 %v815, %v805
        %v1066 = vpack.c.b16 %v816, %v806
        %v1067 = vpack.c.b16 %v817, %v807
        %v1068 = vpack.c.b16 %v818, %v808
        %v1069 = vpack.c.b16 %v819, %v809
        %v1070 = vpack.c.b16 %v820, %v810
        %v1071 = vpack.c.b16 %v821, %v811
        %v1072 = vpack.c.b16 %v822, %v812
        %v1073 = vpack.c.b16 %v833, %v823
        %v1074 = vpack.c.b16 %v834, %v824
        %v1075 = vpack.c.b16 %v835, %v825
        %v1076 = vpack.c.b16 %v836, %v826
        %v1077 = vpack.c.b16 %v837, %v827
        %v1078 = vpack.c.b16 %v838, %v828
        %v1079 = vpack.c.b16 %v839, %v829
        %v1080 = vpack.c.b16 %v840, %v830
        %v1081 = vpack.c.b16 %v841, %v831
        %v1082 = vpack.c.b16 %v842, %v832
        %v1083 = vpack.c.b16 %v853, %v843
        %v1084 = vpack.c.b16 %v854, %v844
        %v1085 = vpack.c.b16 %v855, %v845
        %v1086 = vpack.c.b16 %v856, %v846
        %v1087 = vpack.c.b16 %v857, %v847
        %v1088 = vpack.c.b16 %v858, %v848
        %v1089 = vpack.c.b16 %v859, %v849
        %v1090 = vpack.c.b16 %v860, %v850
        %v1091 = vpack.c.b16 %v861, %v851
        %v1092 = vpack.c.b16 %v862, %v852
        %v1093 = vpack.c.b16 %v873, %v863
        %v1094 = vpack.c.b16 %v874, %v864
        %v1095 = vpack.c.b16 %v875, %v865
        %v1096 = vpack.c.b16 %v876, %v866
        %v1097 = vpack.c.b16 %v877, %v867
        %v1098 = vpack.c.b16 %v878, %v868
        %v1099 = vpack.c.b16 %v879, %v869
        %v1100 = vpack.c.b16 %v880, %v870
        %v1101 = vpack.c.b16 %v881, %v871
        %v1102 = vpack.c.b16 %v882, %v872
        %v1103 = vpack.c.b16 %v893, %v883
        %v1104 = vpack.c.b16 %v894, %v884
        %v1105 = vpack.c.b16 %v895, %v885
        %v1106 = vpack.c.b16 %v896, %v886
        %v1107 = vpack.c.b16 %v897, %v887
        %v1108 = vpack.c.b16 %v898, %v888
        %v1109 = vpack.c.b16 %v899, %v889
        %v1110 = vpack.c.b16 %v900, %v890
        %v1111 = vpack.c.b16 %v901, %v891
        %v1112 = vpack.c.b16 %v902, %v892
        %v1113 = vpack.c.b16 %v913, %v903
        %v1114 = vpack.c.b16 %v914, %v904
        %v1115 = vpack.c.b16 %v915, %v905
        %v1116 = vpack.c.b16 %v916, %v906
        %v1117 = vpack.c.b16 %v917, %v907
        %v1118 = vpack.c.b16 %v918, %v908
        %v1119 = vpack.c.b16 %v919, %v909
        %v1120 = vpack.c.b16 %v920, %v910
        %v1121 = vpack.c.b16 %v921, %v911
        %v1122 = vpack.c.b16 %v922, %v912
        %v1123 = vpack.c.b16 %v933, %v923
        %v1124 = vpack.c.b16 %v934, %v924
        %v1125 = vpack.c.b16 %v935, %v925
        %v1126 = vpack.c.b16 %v936, %v926
        %v1127 = vpack.c.b16 %v937, %v927
        %v1128 = vpack.c.b16 %v938, %v928
        %v1129 = vpack.c.b16 %v939, %v929
        %v1130 = vpack.c.b16 %v940, %v930
        %v1131 = vpack.c.b16 %v941, %v931
        %v1132 = vpack.c.b16 %v942, %v932
        %v1133 = vpack.c.b16 %v953, %v943
        %v1134 = vpack.c.b16 %v954, %v944
        %v1135 = vpack.c.b16 %v955, %v945
        %v1136 = vpack.c.b16 %v956, %v946
        %v1137 = vpack.c.b16 %v957, %v947
        %v1138 = vpack.c.b16 %v958, %v948
        %v1139 = vpack.c.b16 %v959, %v949
        %v1140 = vpack.c.b16 %v960, %v950
        %v1141 = vpack.c.b16 %v961, %v951
        %v1142 = vpack.c.b16 %v962, %v952
        %v1143 = vpack.c.b16 %v973, %v963
        %v1144 = vpack.c.b16 %v974, %v964
        %v1145 = vpack.c.b16 %v975, %v965
        %v1146 = vpack.c.b16 %v976, %v966
        %v1147 = vpack.c.b16 %v977, %v967
        %v1148 = vpack.c.b16 %v978, %v968
        %v1149 = vpack.c.b16 %v979, %v969
        %v1150 = vpack.c.b16 %v980, %v970
        %v1151 = vpack.c.b16 %v981, %v971
        %v1152 = vpack.c.b16 %v982, %v972
        %v1153 = vpack.c.b16 %v993, %v983
        %v1154 = vpack.c.b16 %v994, %v984
        %v1155 = vpack.c.b16 %v995, %v985
        %v1156 = vpack.c.b16 %v996, %v986
        %v1157 = vpack.c.b16 %v997, %v987
        %v1158 = vpack.c.b16 %v998, %v988
        %v1159 = vpack.c.b16 %v999, %v989
        %v1160 = vpack.c.b16 %v1000, %v990
        %v1161 = vpack.c.b16 %v1001, %v991
        %v1162 = vpack.c.b16 %v1002, %v992
        %1323 = vmatprep.subr.bf16.mxu0 %v1004
        %1324 = vmatpush1.bf16.xpose.msra.mxu0 %v1003
        %1325 = vmatprep.subr.bf16.mxu0 %v1014
        %1326 = vmatpush1.bf16.xpose.msra.mxu0 %v1013
        %1327 = vmatprep.subr.bf16.mxu0 %v1024
        %1328 = vmatpush1.bf16.xpose.msra.mxu0 %v1023
        %1329 = vmatprep.subr.bf16.mxu0 %v1034
        %1330 = vmatpush1.bf16.xpose.msra.mxu0 %v1033
        %1331 = vmatprep.subr.bf16.mxu0 %v1044
        %1332 = vmatpush1.bf16.xpose.msra.mxu0 %v1043
        %1333 = vmatprep.subr.bf16.mxu0 %v1054
        %1334 = vmatpush1.bf16.xpose.msra.mxu0 %v1053
        %1335 = vmatprep.subr.bf16.mxu0 %v1064
        %1336 = vmatpush1.bf16.xpose.msra.mxu0 %v1063
        %1337 = vmatprep.subr.bf16.mxu0 %v1074
        %1338 = vmatpush1.bf16.xpose.msra.mxu0 %v1073
        %1339 = vmatprep.subr.bf16.mxu0 %v1084
        %1340 = vmatpush1.bf16.xpose.msra.mxu0 %v1083
        %1341 = vmatprep.subr.bf16.mxu0 %v1094
        %1342 = vmatpush1.bf16.xpose.msra.mxu0 %v1093
        %1343 = vmatprep.subr.bf16.mxu0 %v1104
        %1344 = vmatpush1.bf16.xpose.msra.mxu0 %v1103
        %1345 = vmatprep.subr.bf16.mxu0 %v1114
        %1346 = vmatpush1.bf16.xpose.msra.mxu0 %v1113
        %1347 = vmatprep.subr.bf16.mxu0 %v1124
        %1348 = vmatpush1.bf16.xpose.msra.mxu0 %v1123
        %1349 = vmatprep.subr.bf16.mxu0 %v1134
        %1350 = vmatpush1.bf16.xpose.msra.mxu0 %v1133
        %1351 = vmatprep.subr.bf16.mxu0 %v1144
        %1352 = vmatpush1.bf16.xpose.msra.mxu0 %v1143
        %1353 = vmatprep.subr.bf16.mxu0 %v1154
        %1354 = vmatpush1.bf16.xpose.msra.mxu0 %v1153
        %1355 = vmatprep.mubr.bf16.mxu0 %v479
        %1356 = vmatmul.mubr.bf16.gmra.mrb[0].mxu0 %v465
        %v1357 = vpop.f32.mrb[0].mxu0
        %v1358 = vadd.f32 %v433, %v1357
        %v1359 = vpop.f32.mrb[0].mxu0
        %v1360 = vadd.f32 %v437, %v1359
        %v1361 = vpop.f32.mrb[0].mxu0
        %v1362 = vpop.f32.mrb[0].mxu0
        %1363 = vdwg.mxu0
        %1364 = vmatprep.subr.bf16.mxu0 %v1006
        %1365 = vmatpush1.bf16.xpose.msra.mxu0 %v1005
        %1366 = vmatprep.subr.bf16.mxu0 %v1016
        %1367 = vmatpush1.bf16.xpose.msra.mxu0 %v1015
        %1368 = vmatprep.subr.bf16.mxu0 %v1026
        %1369 = vmatpush1.bf16.xpose.msra.mxu0 %v1025
        %1370 = vmatprep.subr.bf16.mxu0 %v1036
        %1371 = vmatpush1.bf16.xpose.msra.mxu0 %v1035
        %1372 = vmatprep.subr.bf16.mxu0 %v1046
        %1373 = vmatpush1.bf16.xpose.msra.mxu0 %v1045
        %1374 = vmatprep.subr.bf16.mxu0 %v1056
        %1375 = vmatpush1.bf16.xpose.msra.mxu0 %v1055
        %1376 = vmatprep.subr.bf16.mxu0 %v1066
        %1377 = vmatpush1.bf16.xpose.msra.mxu0 %v1065
        %1378 = vmatprep.subr.bf16.mxu0 %v1076
        %1379 = vmatpush1.bf16.xpose.msra.mxu0 %v1075
        %1380 = vmatprep.subr.bf16.mxu0 %v1086
        %1381 = vmatpush1.bf16.xpose.msra.mxu0 %v1085
        %1382 = vmatprep.subr.bf16.mxu0 %v1096
        %1383 = vmatpush1.bf16.xpose.msra.mxu0 %v1095
        %1384 = vmatprep.subr.bf16.mxu0 %v1106
        %1385 = vmatpush1.bf16.xpose.msra.mxu0 %v1105
        %1386 = vmatprep.subr.bf16.mxu0 %v1116
        %1387 = vmatpush1.bf16.xpose.msra.mxu0 %v1115
        %1388 = vmatprep.subr.bf16.mxu0 %v1126
        %1389 = vmatpush1.bf16.xpose.msra.mxu0 %v1125
        %1390 = vmatprep.subr.bf16.mxu0 %v1136
        %1391 = vmatpush1.bf16.xpose.msra.mxu0 %v1135
        %1392 = vmatprep.subr.bf16.mxu0 %v1146
        %1393 = vmatpush1.bf16.xpose.msra.mxu0 %v1145
        %1394 = vmatprep.subr.bf16.mxu0 %v1156
        %1395 = vmatpush1.bf16.xpose.msra.mxu0 %v1155
        %1396 = vmatprep.mubr.bf16.mxu0 %v489
        %1397 = vmatmul.mubr.bf16.gmra.mrb[0].mxu0 %v487
        %v1398 = vpop.f32.mrb[0].mxu0
        %v1399 = vadd.f32 %v1358, %v1398
        %v1400 = vpop.f32.mrb[0].mxu0
        %v1401 = vadd.f32 %v1360, %v1400
        %v1402 = vpop.f32.mrb[0].mxu0
        %v1403 = vpop.f32.mrb[0].mxu0
        %1404 = vdwg.mxu0
        %1405 = vmatprep.subr.bf16.mxu0 %v1008
        %1406 = vmatpush1.bf16.xpose.msra.mxu0 %v1007
        %1407 = vmatprep.subr.bf16.mxu0 %v1018
        %1408 = vmatpush1.bf16.xpose.msra.mxu0 %v1017
        %1409 = vmatprep.subr.bf16.mxu0 %v1028
        %1410 = vmatpush1.bf16.xpose.msra.mxu0 %v1027
        %1411 = vmatprep.subr.bf16.mxu0 %v1038
        %1412 = vmatpush1.bf16.xpose.msra.mxu0 %v1037
        %1413 = vmatprep.subr.bf16.mxu0 %v1048
        %1414 = vmatpush1.bf16.xpose.msra.mxu0 %v1047
        %1415 = vmatprep.subr.bf16.mxu0 %v1058
        %1416 = vmatpush1.bf16.xpose.msra.mxu0 %v1057
        %1417 = vmatprep.subr.bf16.mxu0 %v1068
        %1418 = vmatpush1.bf16.xpose.msra.mxu0 %v1067
        %1419 = vmatprep.subr.bf16.mxu0 %v1078
        %1420 = vmatpush1.bf16.xpose.msra.mxu0 %v1077
        %1421 = vmatprep.subr.bf16.mxu0 %v1088
        %1422 = vmatpush1.bf16.xpose.msra.mxu0 %v1087
        %1423 = vmatprep.subr.bf16.mxu0 %v1098
        %1424 = vmatpush1.bf16.xpose.msra.mxu0 %v1097
        %1425 = vmatprep.subr.bf16.mxu0 %v1108
        %1426 = vmatpush1.bf16.xpose.msra.mxu0 %v1107
        %1427 = vmatprep.subr.bf16.mxu0 %v1118
        %1428 = vmatpush1.bf16.xpose.msra.mxu0 %v1117
        %1429 = vmatprep.subr.bf16.mxu0 %v1128
        %1430 = vmatpush1.bf16.xpose.msra.mxu0 %v1127
        %1431 = vmatprep.subr.bf16.mxu0 %v1138
        %1432 = vmatpush1.bf16.xpose.msra.mxu0 %v1137
        %1433 = vmatprep.subr.bf16.mxu0 %v1148
        %1434 = vmatpush1.bf16.xpose.msra.mxu0 %v1147
        %1435 = vmatprep.subr.bf16.mxu0 %v1158
        %1436 = vmatpush1.bf16.xpose.msra.mxu0 %v1157
        %1437 = vmatprep.mubr.bf16.mxu0 %v486
        %1438 = vmatmul.mubr.bf16.gmra.mrb[0].mxu0 %v472
        %v1439 = vpop.f32.mrb[0].mxu0
        %v1440 = vadd.f32 %v1399, %v1439
        %v1441 = vpop.f32.mrb[0].mxu0
        %v1442 = vadd.f32 %v1401, %v1441
        %v1443 = vpop.f32.mrb[0].mxu0
        %v1444 = vpop.f32.mrb[0].mxu0
        %1445 = vdwg.mxu0
        %1446 = vmatprep.subr.bf16.mxu0 %v1010
        %1447 = vmatpush1.bf16.xpose.msra.mxu0 %v1009
        %1448 = vmatprep.subr.bf16.mxu0 %v1020
        %1449 = vmatpush1.bf16.xpose.msra.mxu0 %v1019
        %1450 = vmatprep.subr.bf16.mxu0 %v1030
        %1451 = vmatpush1.bf16.xpose.msra.mxu0 %v1029
        %1452 = vmatprep.subr.bf16.mxu0 %v1040
        %1453 = vmatpush1.bf16.xpose.msra.mxu0 %v1039
        %1454 = vmatprep.subr.bf16.mxu0 %v1050
        %1455 = vmatpush1.bf16.xpose.msra.mxu0 %v1049
        %1456 = vmatprep.subr.bf16.mxu0 %v1060
        %1457 = vmatpush1.bf16.xpose.msra.mxu0 %v1059
        %1458 = vmatprep.subr.bf16.mxu0 %v1070
        %1459 = vmatpush1.bf16.xpose.msra.mxu0 %v1069
        %1460 = vmatprep.subr.bf16.mxu0 %v1080
        %1461 = vmatpush1.bf16.xpose.msra.mxu0 %v1079
        %1462 = vmatprep.subr.bf16.mxu0 %v1090
        %1463 = vmatpush1.bf16.xpose.msra.mxu0 %v1089
        %1464 = vmatprep.subr.bf16.mxu0 %v1100
        %1465 = vmatpush1.bf16.xpose.msra.mxu0 %v1099
        %1466 = vmatprep.subr.bf16.mxu0 %v1110
        %1467 = vmatpush1.bf16.xpose.msra.mxu0 %v1109
        %1468 = vmatprep.subr.bf16.mxu0 %v1120
        %1469 = vmatpush1.bf16.xpose.msra.mxu0 %v1119
        %1470 = vmatprep.subr.bf16.mxu0 %v1130
        %1471 = vmatpush1.bf16.xpose.msra.mxu0 %v1129
        %1472 = vmatprep.subr.bf16.mxu0 %v1140
        %1473 = vmatpush1.bf16.xpose.msra.mxu0 %v1139
        %1474 = vmatprep.subr.bf16.mxu0 %v1150
        %1475 = vmatpush1.bf16.xpose.msra.mxu0 %v1149
        %1476 = vmatprep.subr.bf16.mxu0 %v1160
        %1477 = vmatpush1.bf16.xpose.msra.mxu0 %v1159
        %1478 = vmatprep.mubr.bf16.mxu0 %v490
        %1479 = vmatmul.mubr.bf16.gmra.mrb[0].mxu0 %v488
        %v1480 = vpop.f32.mrb[0].mxu0
        %v1481 = vadd.f32 %v1440, %v1480
        %v1482 = vpop.f32.mrb[0].mxu0
        %v1483 = vadd.f32 %v1442, %v1482
        %v1484 = vpop.f32.mrb[0].mxu0
        %v1485 = vpop.f32.mrb[0].mxu0
        %1486 = vdwg.mxu0
        %1487 = vmatprep.subr.bf16.mxu0 %v1012
        %1488 = vmatpush1.bf16.xpose.msra.mxu0 %v1011
        %1489 = vmatprep.subr.bf16.mxu0 %v1022
        %1490 = vmatpush1.bf16.xpose.msra.mxu0 %v1021
        %1491 = vmatprep.subr.bf16.mxu0 %v1032
        %1492 = vmatpush1.bf16.xpose.msra.mxu0 %v1031
        %1493 = vmatprep.subr.bf16.mxu0 %v1042
        %1494 = vmatpush1.bf16.xpose.msra.mxu0 %v1041
        %1495 = vmatprep.subr.bf16.mxu0 %v1052
        %1496 = vmatpush1.bf16.xpose.msra.mxu0 %v1051
        %1497 = vmatprep.subr.bf16.mxu0 %v1062
        %1498 = vmatpush1.bf16.xpose.msra.mxu0 %v1061
        %1499 = vmatprep.subr.bf16.mxu0 %v1072
        %1500 = vmatpush1.bf16.xpose.msra.mxu0 %v1071
        %1501 = vmatprep.subr.bf16.mxu0 %v1082
        %1502 = vmatpush1.bf16.xpose.msra.mxu0 %v1081
        %1503 = vmatprep.subr.bf16.mxu0 %v1092
        %1504 = vmatpush1.bf16.xpose.msra.mxu0 %v1091
        %1505 = vmatprep.subr.bf16.mxu0 %v1102
        %1506 = vmatpush1.bf16.xpose.msra.mxu0 %v1101
        %1507 = vmatprep.subr.bf16.mxu0 %v1112
        %1508 = vmatpush1.bf16.xpose.msra.mxu0 %v1111
        %1509 = vmatprep.subr.bf16.mxu0 %v1122
        %1510 = vmatpush1.bf16.xpose.msra.mxu0 %v1121
        %1511 = vmatprep.subr.bf16.mxu0 %v1132
        %1512 = vmatpush1.bf16.xpose.msra.mxu0 %v1131
        %1513 = vmatprep.subr.bf16.mxu0 %v1142
        %1514 = vmatpush1.bf16.xpose.msra.mxu0 %v1141
        %1515 = vmatprep.subr.bf16.mxu0 %v1152
        %1516 = vmatpush1.bf16.xpose.msra.mxu0 %v1151
        %1517 = vmatprep.subr.bf16.mxu0 %v1162
        %1518 = vmatpush1.bf16.xpose.msra.mxu0 %v1161
        %1519 = vmatprep.mubr.bf16.mxu0 %v512
        %1520 = vmatmul.mubr.bf16.gmra.mrb[0].mxu0 %v505
        %v1521 = vpop.f32.mrb[0].mxu0
        %v1522 = vadd.f32 %v1481, %v1521
        %v1523 = vpop.f32.mrb[0].mxu0
        %v1524 = vadd.f32 %v1483, %v1523
        %v1525 = vpop.f32.mrb[0].mxu0
        %v1526 = vpop.f32.mrb[0].mxu0
        %1527 = vdwg.mxu0
        %v1530 = vcombine.low %v1522, %v1524
        %v1532 = vunpack.c.l.s4 1983009808
        %v1533 = vunpack.c.0.s8 %v1532
        %v1534 = vlaneseq
        %v1535 = vshrl.u32 %v1534, 7
        %v1536 = vsub.s32 %v1533, %v1535
        %v1537 = vrot.slane %v1530, %v1536
        %1539 = vst [vmem:[%s249] sm:$0xf] %v1537
        %s1540 = sand.u32 %s102, 1
        %s1541 = scalar_lea.sflag [#allocation4], %s1540
        %s1542 = sand.u32 %s102, 1
        %s1543 = smul.addr %s1542, 4
        %s1544 = scalar_lea.vmem [#allocation8], %s1543
        // Predicated region
        $region45: #{tpu_custom_call.1} parent=31 // pred_check
          %p1545 = pneg %p112
        $region46: #{tpu_custom_call.1} parent=31 // pred_check_branch
          %1547 = sbr.rel (%p1545) target = $region48
        $region47: #{tpu_custom_call.1} parent=31 // pred_region
          %s1548 = smul.u32 2, %s21
          %s1549 = ssub.s32 7, %s1548
          %p1550 = scmp.lt.s32.totalorder %s1549, 2
          %s1551 = scalar_select %p1550, %s1549, 2
          %s1552 = smul.u32 32, %s1551
          %s1554 = ssub.s32 64, %s1552
          %1555 = vsyncadd %s1541, %s1554
          %p1556 = scmp.ne.s32.totalorder 0, %s1552
          %s1557 = smul.addr %s1548, 32
          %s1558 = scalar_lea.hbm %s3, %s1557
          %s1559 = smul.u32 %s1551, 2
          %s1560 = sshll.u32 %s1559, 4
          %s1561 = sshll.u32 %s1544, 4
          %s1562 = int_to_ptr.vmem [resolvable:$true] %s1561
          %1564 = dma.vmem_to_hbm [thread:$0]  (%p1556), %s1562, %s1560, %s1558, %s1541
        $region48: #{tpu_custom_call.1} parent=31 // pred_fallthru
          _
      $region32: #{tpu_custom_call.1} parent=5 // pred_fallthru
        _
      %p1565 = scmp.le.s32.totalorder 2, %s16
      // Predicated region
      $region49: #{tpu_custom_call.1} parent=5 // pred_check
        %p1566 = pneg %p1565
      $region50: #{tpu_custom_call.1} parent=5 // pred_check_branch
        %1568 = sbr.rel (%p1566) target = $region52
      $region51: #{tpu_custom_call.1} parent=5 // pred_region
        %s1569 = ssub.s32 %s16, 2
        // Predicated region
        $region53: #{tpu_custom_call.1} parent=51 // pred_check
          %p1570 = pneg %p118
        $region54: #{tpu_custom_call.1} parent=51 // pred_check_branch
          %1572 = sbr.rel (%p1570) target = $region56
        $region55: #{tpu_custom_call.1} parent=51 // pred_region
          %s1573 = sand.u32 %s103, 1
          %s1574 = scalar_lea.sflag [#allocation4], %s1573
          %s1575 = sand.u32 %s103, 1
          %s1576 = smul.addr %s1575, 4
          %s1577 = scalar_lea.vmem [#allocation8], %s1576
          %1578 = dma.done %s1574, 64
        $region56: #{tpu_custom_call.1} parent=51 // pred_fallthru
          _
      $region52: #{tpu_custom_call.1} parent=5 // pred_fallthru
        _
    $region6: #{tpu_custom_call.1} parent=1 // loop_footer
      %s20 = sadd.s32 1, %s16
    $region7: #{tpu_custom_call.1} parent=1 // loop_footer_branch
      %15 = sbr.rel target = $region3
    $region8: #{tpu_custom_call.1} parent=1 // loop_exit
      _
    %1579 = vsyncpa [#allocation3], 1
    %s1580 = scalar_lea.sflag [#allocation3], 1
    %1581 = vsyncpa %s1580, 1
    %1582 = vsyncpa [#allocation6], 1
    %s1583 = scalar_lea.sflag [#allocation6], 1
    %1584 = vsyncpa %s1583, 1
    %1585 = vsyncpa [#allocation4], 1
    %s1586 = scalar_lea.sflag [#allocation4], 1
    %1587 = vsyncpa %s1586, 1

</llo_original>
